<compile_context>
chip_gen: v6e
topology: v6e:2x2x1
jax: 0.10.0
libtpu: 0.0.40
codegen_flags: <defaults>
</compile_context>

<pallas_src>
import math

import jax
import jax.numpy as jnp
from jax import lax
from jax.experimental import pallas as pl
from jax.experimental.pallas import tpu as pltpu


def prepare_attention_params(params, msg_dim):
    """One-time parameter prep (off the hot path).

    params = (wq, bq, wk, bk, wv, bv); weights are [in_features, out_features]
    (PyTorch weights pre-transposed), biases are [1, out_features].
    Folds the 1/sqrt(msg_dim) attention scale into wq / bq so the kernel never
    multiplies the logits.
    """
    wq, bq, wk, bk, wv, bv = params
    scale = 1.0 / math.sqrt(msg_dim)
    f32 = lambda a: jnp.asarray(a, jnp.float32)
    return (f32(wq) * scale, f32(bq) * scale, f32(wk), f32(bk), f32(wv), f32(bv))


def _make_kernel(b, nq, nk, msg_dim, out_dim):
    big = jnp.iinfo(jnp.int32).max

    def kernel(q_ref, k_ref, v_ref,
               wq_ref, bq_ref, wk_ref, bk_ref, wv_ref, bv_ref,
               out_ref, amax_ref):
        # Projections as single large-M MXU matmuls over the flattened batch
        # (B*n rows instead of n rows per grid step), f32 accumulation.
        q = jnp.dot(q_ref[...], wq_ref[...],
                    preferred_element_type=jnp.float32) + bq_ref[...]
        k = jnp.dot(k_ref[...], wk_ref[...],
                    preferred_element_type=jnp.float32) + bk_ref[...]
        v = jnp.dot(v_ref[...], wv_ref[...],
                    preferred_element_type=jnp.float32) + bv_ref[...]

        # Unflatten the leading dim. nq/nk are multiples of 8, so these splits
        # land exactly on (8,128) sublane-tile boundaries -> layout-preserving.
        q = q.reshape(b, nq, msg_dim)
        k = k.reshape(b, nk, msg_dim)
        v = v.reshape(b, nk, out_dim)

        # Scaled logits (scale already folded into wq/bq). Contract the last
        # dims of q and k -> no materialized K transpose.
        logits = jnp.einsum("bqd,bkd->bqk", q, k,
                            preferred_element_type=jnp.float32)

        # Row max (reused for the stable softmax and the argmax).
        m = jnp.max(logits, axis=-1, keepdims=True)

        # argmax over keys on the logits (softmax is strictly monotone, so the
        # argmax is identical); first occurrence, like torch.argmax.
        idx = lax.broadcasted_iota(jnp.int32, logits.shape, 2)
        amax_ref[...] = jnp.min(jnp.where(logits == m, idx, big), axis=-1)

        # Numerically stable softmax; normalization folded after A@V and done
        # with an EXACT divide (approx reciprocal removed for accuracy).
        e = jnp.exp(logits - m)
        s = jnp.sum(e, axis=-1, keepdims=True)
        av = jnp.einsum("bqk,bkd->bqd", e, v,
                        preferred_element_type=jnp.float32)
        out_ref[...] = (av / s).astype(out_ref.dtype)

    return kernel


def attention_layer(data_q, data_k, data_v, prepared_params, msg_dim, out_dim):
    """Forward pass. Accepts [N, D] or [B, N, D] activations.

    Returns (output [..., n_q, out_dim] f32, argmax indices [..., n_q] int32).
    """
    squeeze_batch = data_q.ndim == 2
    if squeeze_batch:
        data_q, data_k, data_v = data_q[None], data_k[None], data_v[None]

    wq, bq, wk, bk, wv, bv = prepared_params
    b, nq, dq = data_q.shape
    _, nk, dk = data_k.shape
    _, _, dv = data_v.shape

    # Flatten batch for the projection matmuls (free XLA reshape of leading dims).
    q_flat = data_q.reshape(b * nq, dq).astype(jnp.float32)
    k_flat = data_k.reshape(b * nk, dk).astype(jnp.float32)
    v_flat = data_v.reshape(b * nk, dv).astype(jnp.float32)

    kernel = _make_kernel(b, nq, nk, msg_dim, out_dim)

    # Single grid step, every operand is one full-array VMEM block (trivially
    # satisfies the (8,128) block constraint because block == full array).
    def full(shape):
        return pl.BlockSpec(shape, lambda i, _s=shape: (0,) * len(_s))

    out, amax = pl.pallas_call(
        kernel,
        grid=(1,),
        in_specs=[
            full((b * nq, dq)),
            full((b * nk, dk)),
            full((b * nk, dv)),
            full((dq, msg_dim)), full((1, msg_dim)),
            full((dk, msg_dim)), full((1, msg_dim)),
            full((dv, out_dim)), full((1, out_dim)),
        ],
        out_specs=(
            full((b, nq, out_dim)),
            full((b, nq)),
        ),
        out_shape=(
            jax.ShapeDtypeStruct((b, nq, out_dim), jnp.float32),
            jax.ShapeDtypeStruct((b, nq), jnp.int32),
        ),
        compiler_params=pltpu.CompilerParams(
            dimension_semantics=("arbitrary",)),
    )(q_flat, k_flat, v_flat, wq, bq, wk, bk, wv, bv)

    if squeeze_batch:
        out, amax = out[0], amax[0]
    return out, amax


def mostly_attended_entries(argmax_indices):
    """Host-side set construction (mirrors the PyTorch module attribute).

    Kept out of the per-call hot path: call once after results are ready
    (forces a single device->host transfer)."""
    return set(int(i) for i in jax.device_get(argmax_indices).ravel())


def _reference(data_q, data_k, data_v, params, msg_dim):
    """Pure-JAX reference (un-scaled params; highest-precision matmuls so the
    reference itself is f32-accurate on real TPU hardware)."""
    wq, bq, wk, bk, wv, bv = params
    hp = jax.lax.Precision.HIGHEST
    q = jnp.dot(data_q, wq, precision=hp) + bq
    k = jnp.dot(data_k, wk, precision=hp) + bk
    v = jnp.dot(data_v, wv, precision=hp) + bv
    logits = jnp.einsum("...qd,...kd->...qk", q, k, precision=hp) / jnp.sqrt(
        jnp.float32(msg_dim))
    a = jax.nn.softmax(logits, axis=-1)
    return jnp.einsum("...qk,...kd->...qd", a, v, precision=hp), jnp.argmax(a, axis=-1)


if __name__ == "__main__":
    # Module hyperparameters (small, consistent with the forward pass).
    dim_in_q = dim_in_k = dim_in_v = 32
    msg_dim, out_dim = 32, 32
    batch, n_q, n_k = 4, 8, 16

    key = jax.random.PRNGKey(0)
    keys = jax.random.split(key, 9)

    # Deterministic nn.Linear-style init, weights stored [in_features, out_features].
    def init_linear(kw, kb, fan_in, fan_out):
        bound = 1.0 / math.sqrt(fan_in)
        w = jax.random.uniform(kw, (fan_in, fan_out), jnp.float32, -bound, bound)
        bias = jax.random.uniform(kb, (1, fan_out), jnp.float32, -bound, bound)
        return w, bias

    wq, bq = init_linear(keys[0], keys[1], dim_in_q, msg_dim)
    wk, bk = init_linear(keys[2], keys[3], dim_in_k, msg_dim)
    wv, bv = init_linear(keys[4], keys[5], dim_in_v, out_dim)
    params = (wq, bq, wk, bk, wv, bv)
    prepared = prepare_attention_params(params, msg_dim)  # once, off the hot path

    data_q = jax.random.normal(keys[6], (batch, n_q, dim_in_q), jnp.float32)
    data_k = jax.random.normal(keys[7], (batch, n_k, dim_in_k), jnp.float32)
    data_v = jax.random.normal(keys[8], (batch, n_k, dim_in_v), jnp.float32)

    # Batched (3-D) path: the whole batch runs in one fused kernel invocation.
    out, amax = attention_layer(data_q, data_k, data_v, prepared, msg_dim, out_dim)
    out, amax = jax.block_until_ready((out, amax))

    ref_out, ref_arg = _reference(data_q, data_k, data_v, params, msg_dim)
    assert out.shape == (batch, n_q, out_dim)
    assert jnp.allclose(out, ref_out, atol=5e-4, rtol=5e-4), "output mismatch vs reference"
    assert jnp.array_equal(amax, ref_arg.astype(jnp.int32)), "argmax mismatch vs reference"

    attended = mostly_attended_entries(amax)   # single host sync, after compute
    assert all(0 <= i < n_k for i in attended)

    # 2-D (unbatched) path, matching the original module's plain-matmul branch.
    out2, amax2 = attention_layer(data_q[0], data_k[0], data_v[0], prepared,
                                  msg_dim, out_dim)
    out2, amax2 = jax.block_until_ready((out2, amax2))
    assert out2.shape == (n_q, out_dim)
    assert jnp.allclose(out2, ref_out[0], atol=5e-4, rtol=5e-4)
    assert jnp.array_equal(amax2, ref_arg[0].astype(jnp.int32))

    print("KERNEL_OK")
</pallas_src>

<mosaic_0001>
module attributes {stable_mosaic.version = 11 : i64} {
  func.func @kernel(%arg0: i32, %arg1: memref<32x32xf32, #tpu.memory_space<vmem>>, %arg2: memref<64x32xf32, #tpu.memory_space<vmem>>, %arg3: memref<64x32xf32, #tpu.memory_space<vmem>>, %arg4: memref<32x32xf32, #tpu.memory_space<vmem>>, %arg5: memref<1x32xf32, #tpu.memory_space<vmem>>, %arg6: memref<32x32xf32, #tpu.memory_space<vmem>>, %arg7: memref<1x32xf32, #tpu.memory_space<vmem>>, %arg8: memref<32x32xf32, #tpu.memory_space<vmem>>, %arg9: memref<1x32xf32, #tpu.memory_space<vmem>>, %arg10: memref<4x8x32xf32, #tpu.memory_space<vmem>>, %arg11: memref<4x8xi32, #tpu.memory_space<vmem>>) attributes {dimension_semantics = [#tpu.dimension_semantics<arbitrary>], iteration_bounds = array<i64: 1>, scalar_prefetch = 0 : i64, scratch_operands = 0 : i64, tpu.core_type = #tpu.core_type<tc>, window_params = [{pipeline_mode = #tpu.pipeline_mode<synchronous>, transform_indices = @transform_0, window_bounds = array<i64: 32, 32>}, {pipeline_mode = #tpu.pipeline_mode<synchronous>, transform_indices = @transform_1, window_bounds = array<i64: 64, 32>}, {pipeline_mode = #tpu.pipeline_mode<synchronous>, transform_indices = @transform_2, window_bounds = array<i64: 64, 32>}, {pipeline_mode = #tpu.pipeline_mode<synchronous>, transform_indices = @transform_3, window_bounds = array<i64: 32, 32>}, {pipeline_mode = #tpu.pipeline_mode<synchronous>, transform_indices = @transform_4, window_bounds = array<i64: 1, 32>}, {pipeline_mode = #tpu.pipeline_mode<synchronous>, transform_indices = @transform_5, window_bounds = array<i64: 32, 32>}, {pipeline_mode = #tpu.pipeline_mode<synchronous>, transform_indices = @transform_6, window_bounds = array<i64: 1, 32>}, {pipeline_mode = #tpu.pipeline_mode<synchronous>, transform_indices = @transform_7, window_bounds = array<i64: 32, 32>}, {pipeline_mode = #tpu.pipeline_mode<synchronous>, transform_indices = @transform_8, window_bounds = array<i64: 1, 32>}, {pipeline_mode = #tpu.pipeline_mode<synchronous>, transform_indices = @transform_9, window_bounds = array<i64: 4, 8, 32>}, {pipeline_mode = #tpu.pipeline_mode<synchronous>, transform_indices = @transform_10, window_bounds = array<i64: 4, 8>}]} {
    %c0 = arith.constant 0 : index
    %c0_0 = arith.constant 0 : index
    %0 = vector.load %arg1[%c0, %c0_0] : memref<32x32xf32, #tpu.memory_space<vmem>>, vector<32x32xf32>
    %c0_1 = arith.constant 0 : index
    %c0_2 = arith.constant 0 : index
    %1 = vector.load %arg4[%c0_1, %c0_2] : memref<32x32xf32, #tpu.memory_space<vmem>>, vector<32x32xf32>
    %cst = arith.constant dense<0.000000e+00> : vector<32x32xf32>
    %2 = tpu.matmul %0, %1, %cst {dimension_numbers = #tpu.dot_dimension_numbers<[1], [0], [0], [1], [0, 0, 1, 1], [], []>} : vector<32x32xf32>, vector<32x32xf32>, vector<32x32xf32> -> vector<32x32xf32>
    %c0_3 = arith.constant 0 : index
    %c0_4 = arith.constant 0 : index
    %3 = vector.load %arg5[%c0_3, %c0_4] : memref<1x32xf32, #tpu.memory_space<vmem>>, vector<1x32xf32>
    %4 = vector.broadcast %3 : vector<1x32xf32> to vector<32x32xf32>
    %5 = arith.addf %2, %4 : vector<32x32xf32>
    %c0_5 = arith.constant 0 : index
    %c0_6 = arith.constant 0 : index
    %6 = vector.load %arg2[%c0_5, %c0_6] : memref<64x32xf32, #tpu.memory_space<vmem>>, vector<64x32xf32>
    %c0_7 = arith.constant 0 : index
    %c0_8 = arith.constant 0 : index
    %7 = vector.load %arg6[%c0_7, %c0_8] : memref<32x32xf32, #tpu.memory_space<vmem>>, vector<32x32xf32>
    %cst_9 = arith.constant dense<0.000000e+00> : vector<64x32xf32>
    %8 = tpu.matmul %6, %7, %cst_9 {dimension_numbers = #tpu.dot_dimension_numbers<[1], [0], [0], [1], [0, 0, 1, 1], [], []>} : vector<64x32xf32>, vector<32x32xf32>, vector<64x32xf32> -> vector<64x32xf32>
    %c0_10 = arith.constant 0 : index
    %c0_11 = arith.constant 0 : index
    %9 = vector.load %arg7[%c0_10, %c0_11] : memref<1x32xf32, #tpu.memory_space<vmem>>, vector<1x32xf32>
    %10 = vector.broadcast %9 : vector<1x32xf32> to vector<64x32xf32>
    %11 = arith.addf %8, %10 : vector<64x32xf32>
    %c0_12 = arith.constant 0 : index
    %c0_13 = arith.constant 0 : index
    %12 = vector.load %arg3[%c0_12, %c0_13] : memref<64x32xf32, #tpu.memory_space<vmem>>, vector<64x32xf32>
    %c0_14 = arith.constant 0 : index
    %c0_15 = arith.constant 0 : index
    %13 = vector.load %arg8[%c0_14, %c0_15] : memref<32x32xf32, #tpu.memory_space<vmem>>, vector<32x32xf32>
    %cst_16 = arith.constant dense<0.000000e+00> : vector<64x32xf32>
    %14 = tpu.matmul %12, %13, %cst_16 {dimension_numbers = #tpu.dot_dimension_numbers<[1], [0], [0], [1], [0, 0, 1, 1], [], []>} : vector<64x32xf32>, vector<32x32xf32>, vector<64x32xf32> -> vector<64x32xf32>
    %c0_17 = arith.constant 0 : index
    %c0_18 = arith.constant 0 : index
    %15 = vector.load %arg9[%c0_17, %c0_18] : memref<1x32xf32, #tpu.memory_space<vmem>>, vector<1x32xf32>
    %16 = vector.broadcast %15 : vector<1x32xf32> to vector<64x32xf32>
    %17 = arith.addf %14, %16 : vector<64x32xf32>
    %18 = vector.shape_cast %5 : vector<32x32xf32> to vector<4x8x32xf32>
    %19 = vector.shape_cast %11 : vector<64x32xf32> to vector<4x16x32xf32>
    %20 = vector.shape_cast %17 : vector<64x32xf32> to vector<4x16x32xf32>
    "tpu.trace_start"() <{level = 10 : i32, message = "bqd,bkd->bqk"}> : () -> ()
    %cst_19 = arith.constant dense<0.000000e+00> : vector<4x8x16xf32>
    %21 = tpu.matmul %18, %19, %cst_19 {dimension_numbers = #tpu.dot_dimension_numbers<[2], [2], [1], [1], [0, 0, 0, 1, 1, 1], [0], [0]>} : vector<4x8x32xf32>, vector<4x16x32xf32>, vector<4x8x16xf32> -> vector<4x8x16xf32>
    "tpu.trace_stop"() : () -> ()
    %cst_20 = arith.constant dense<0xFF800000> : vector<4x8xf32>
    %22 = vector.multi_reduction <maximumf>, %21, %cst_20 [2] : vector<4x8x16xf32> to vector<4x8xf32>
    %23 = vector.shape_cast %22 : vector<4x8xf32> to vector<4x8x1xf32>
    %24 = tpu.iota {dimensions = array<i32: 2>} : vector<4x8x16xi32>
    %25 = vector.broadcast %23 : vector<4x8x1xf32> to vector<4x8x16xf32>
    %26 = arith.cmpf oeq, %21, %25 : vector<4x8x16xf32>
    %c2147483647_i32 = arith.constant 2147483647 : i32
    %27 = vector.broadcast %c2147483647_i32 : i32 to vector<4x8x16xi32>
    %28 = arith.select %26, %24, %27 : vector<4x8x16xi1>, vector<4x8x16xi32>
    %cst_21 = arith.constant dense<2147483647> : vector<4x8xi32>
    %29 = vector.multi_reduction <minsi>, %28, %cst_21 [2] : vector<4x8x16xi32> to vector<4x8xi32>
    %c0_22 = arith.constant 0 : index
    %c0_23 = arith.constant 0 : index
    %30 = vector.load %arg11[%c0_22, %c0_23] : memref<4x8xi32, #tpu.memory_space<vmem>>, vector<4x8xi32>
    tpu.vector_store %arg11[%c0_22, %c0_23], %29 {strides = array<i32>} : memref<4x8xi32, #tpu.memory_space<vmem>>, vector<4x8xi32>,
    %31 = vector.broadcast %23 : vector<4x8x1xf32> to vector<4x8x16xf32>
    %32 = arith.subf %21, %31 : vector<4x8x16xf32>
    %33 = math.exp %32 : vector<4x8x16xf32>
    %cst_24 = arith.constant dense<0.000000e+00> : vector<4x8xf32>
    %34 = vector.multi_reduction <add>, %33, %cst_24 [2] : vector<4x8x16xf32> to vector<4x8xf32>
    %35 = vector.shape_cast %34 : vector<4x8xf32> to vector<4x8x1xf32>
    "tpu.trace_start"() <{level = 10 : i32, message = "bqk,bkd->bqd"}> : () -> ()
    %cst_25 = arith.constant dense<0.000000e+00> : vector<4x8x32xf32>
    %36 = tpu.matmul %33, %20, %cst_25 {dimension_numbers = #tpu.dot_dimension_numbers<[2], [1], [1], [2], [0, 0, 0, 1, 1, 2], [0], [0]>} : vector<4x8x16xf32>, vector<4x16x32xf32>, vector<4x8x32xf32> -> vector<4x8x32xf32>
    "tpu.trace_stop"() : () -> ()
    %37 = vector.broadcast %35 : vector<4x8x1xf32> to vector<4x8x32xf32>
    %38 = arith.divf %36, %37 : vector<4x8x32xf32>
    %c0_26 = arith.constant 0 : index
    %c0_27 = arith.constant 0 : index
    %c0_28 = arith.constant 0 : index
    %39 = vector.load %arg10[%c0_26, %c0_27, %c0_28] : memref<4x8x32xf32, #tpu.memory_space<vmem>>, vector<4x8x32xf32>
    tpu.vector_store %arg10[%c0_26, %c0_27, %c0_28], %38 {strides = array<i32>} : memref<4x8x32xf32, #tpu.memory_space<vmem>>, vector<4x8x32xf32>,
    return
  }
  func.func @transform_0(%arg0: i32) -> (i32, i32) {
    %c0_i32 = arith.constant 0 : i32
    %c0_i32_0 = arith.constant 0 : i32
    %c0_i32_1 = arith.constant 0 : i32
    return %c0_i32, %c0_i32_0 : i32, i32
  }
  func.func @transform_1(%arg0: i32) -> (i32, i32) {
    %c0_i32 = arith.constant 0 : i32
    %c0_i32_0 = arith.constant 0 : i32
    %c0_i32_1 = arith.constant 0 : i32
    return %c0_i32, %c0_i32_0 : i32, i32
  }
  func.func @transform_2(%arg0: i32) -> (i32, i32) {
    %c0_i32 = arith.constant 0 : i32
    %c0_i32_0 = arith.constant 0 : i32
    %c0_i32_1 = arith.constant 0 : i32
    return %c0_i32, %c0_i32_0 : i32, i32
  }
  func.func @transform_3(%arg0: i32) -> (i32, i32) {
    %c0_i32 = arith.constant 0 : i32
    %c0_i32_0 = arith.constant 0 : i32
    %c0_i32_1 = arith.constant 0 : i32
    return %c0_i32, %c0_i32_0 : i32, i32
  }
  func.func @transform_4(%arg0: i32) -> (i32, i32) {
    %c0_i32 = arith.constant 0 : i32
    %c0_i32_0 = arith.constant 0 : i32
    %c0_i32_1 = arith.constant 0 : i32
    return %c0_i32, %c0_i32_0 : i32, i32
  }
  func.func @transform_5(%arg0: i32) -> (i32, i32) {
    %c0_i32 = arith.constant 0 : i32
    %c0_i32_0 = arith.constant 0 : i32
    %c0_i32_1 = arith.constant 0 : i32
    return %c0_i32, %c0_i32_0 : i32, i32
  }
  func.func @transform_6(%arg0: i32) -> (i32, i32) {
    %c0_i32 = arith.constant 0 : i32
    %c0_i32_0 = arith.constant 0 : i32
    %c0_i32_1 = arith.constant 0 : i32
    return %c0_i32, %c0_i32_0 : i32, i32
  }
  func.func @transform_7(%arg0: i32) -> (i32, i32) {
    %c0_i32 = arith.constant 0 : i32
    %c0_i32_0 = arith.constant 0 : i32
    %c0_i32_1 = arith.constant 0 : i32
    return %c0_i32, %c0_i32_0 : i32, i32
  }
  func.func @transform_8(%arg0: i32) -> (i32, i32) {
    %c0_i32 = arith.constant 0 : i32
    %c0_i32_0 = arith.constant 0 : i32
    %c0_i32_1 = arith.constant 0 : i32
    return %c0_i32, %c0_i32_0 : i32, i32
  }
  func.func @transform_9(%arg0: i32) -> (i32, i32, i32) {
    %c0_i32 = arith.constant 0 : i32
    %c0_i32_0 = arith.constant 0 : i32
    %c0_i32_1 = arith.constant 0 : i32
    %c0_i32_2 = arith.constant 0 : i32
    return %c0_i32, %c0_i32_0, %c0_i32_1 : i32, i32, i32
  }
  func.func @transform_10(%arg0: i32) -> (i32, i32) {
    %c0_i32 = arith.constant 0 : i32
    %c0_i32_0 = arith.constant 0 : i32
    %c0_i32_1 = arith.constant 0 : i32
    return %c0_i32, %c0_i32_0 : i32, i32
  }
}

</mosaic_0001>

<llo_original>
// kernel: tpu_custom_call.1
$region0: #{tpu_custom_call.1}
  #allocation0 [shape = 'u32[]', space=smem, size = 0x4, offset = 0x4, fixed_abs, tag = 'smem constant byte address 0x4 - core index']
  #allocation1 [shape = 'u32[144,128]{1,0:T(1,128)}', space=vmem, size = 0x12000, scoped, tag = 'internal scratch']
  %s0 = inlined_call_operand.vmem [shape: f32[32,32], index: 0, kind: input, shape index: {}]
  %s1 = inlined_call_operand.vmem [shape: f32[64,32], index: 1, kind: input, shape index: {}]
  %s2 = inlined_call_operand.vmem [shape: f32[64,32], index: 2, kind: input, shape index: {}]
  %s3 = inlined_call_operand.vmem [shape: f32[32,32], index: 3, kind: input, shape index: {}]
  %s4 = inlined_call_operand.vmem [shape: f32[1,32], index: 4, kind: input, shape index: {}]
  %s5 = inlined_call_operand.vmem [shape: f32[32,32], index: 5, kind: input, shape index: {}]
  %s6 = inlined_call_operand.vmem [shape: f32[1,32], index: 6, kind: input, shape index: {}]
  %s7 = inlined_call_operand.vmem [shape: f32[32,32], index: 7, kind: input, shape index: {}]
  %s8 = inlined_call_operand.vmem [shape: f32[1,32], index: 8, kind: input, shape index: {}]
  %s9 = inlined_call_operand.hbm [shape: f32[4,8,32], index: 9, kind: output, shape index: {0}]
  %s10 = inlined_call_operand.hbm [shape: s32[4,8], index: 10, kind: output, shape index: {1}]
  %11 = xla_tuple %s9, %s10
  %s12 = sld [smem:[#allocation0]]
  $region54: #{tpu_custom_call.1} parent=0
    _
  %s14 = ssub.s32 1, %s12
  %s15 = scalar_select 0, %s14, %s12
  $region1: #{tpu_custom_call.1} parent=0
    #allocation2 [shape = 'u8[16384]{0}', space=vmem, size = 0x4000, scoped, tag = 'output window, operand 0, single buffered']
    #allocation3 [shape = 's32[1]{0}', space=sflag, size = 0x4, scoped, tag = 'scoped memory for tpu_custom_call.1']
    #allocation4 [shape = 'u8[2048]{0}', space=vmem, size = 0x800, scoped, tag = 'output window, operand 1, single buffered']
    #allocation5 [shape = 's32[1]{0}', space=sflag, size = 0x4, scoped, tag = 'scoped memory for tpu_custom_call.1']
    %16 = vsyncpa [#allocation3], 0
    %17 = vsyncpa [#allocation5], 0
    // Predicated region
    $region2: #{tpu_custom_call.1} parent=1 // pred_check
      _
    $region3: #{tpu_custom_call.1} parent=1 // pred_check_branch
      %19 = sbr.rel (0) target = $region5
    $region4: #{tpu_custom_call.1} parent=1 // pred_region
      _
    $region5: #{tpu_custom_call.1} parent=1 // pred_fallthru
      _
    // Predicated region
    $region6: #{tpu_custom_call.1} parent=1 // pred_check
      _
    $region7: #{tpu_custom_call.1} parent=1 // pred_check_branch
      %21 = sbr.rel (0) target = $region9
    $region8: #{tpu_custom_call.1} parent=1 // pred_region
      _
    $region9: #{tpu_custom_call.1} parent=1 // pred_fallthru
      _
    // Predicated region
    $region10: #{tpu_custom_call.1} parent=1 // pred_check
      _
    $region11: #{tpu_custom_call.1} parent=1 // pred_check_branch
      %23 = sbr.rel (0) target = $region13
    $region12: #{tpu_custom_call.1} parent=1 // pred_region
      _
    $region13: #{tpu_custom_call.1} parent=1 // pred_fallthru
      _
    // Predicated region
    $region14: #{tpu_custom_call.1} parent=1 // pred_check
      _
    $region15: #{tpu_custom_call.1} parent=1 // pred_check_branch
      %25 = sbr.rel (0) target = $region17
    $region16: #{tpu_custom_call.1} parent=1 // pred_region
      _
    $region17: #{tpu_custom_call.1} parent=1 // pred_fallthru
      _
    // Predicated region
    $region18: #{tpu_custom_call.1} parent=1 // pred_check
      _
    $region19: #{tpu_custom_call.1} parent=1 // pred_check_branch
      %27 = sbr.rel (0) target = $region21
    $region20: #{tpu_custom_call.1} parent=1 // pred_region
      _
    $region21: #{tpu_custom_call.1} parent=1 // pred_fallthru
      _
    // Predicated region
    $region22: #{tpu_custom_call.1} parent=1 // pred_check
      _
    $region23: #{tpu_custom_call.1} parent=1 // pred_check_branch
      %29 = sbr.rel (0) target = $region25
    $region24: #{tpu_custom_call.1} parent=1 // pred_region
      _
    $region25: #{tpu_custom_call.1} parent=1 // pred_fallthru
      _
    // Predicated region
    $region26: #{tpu_custom_call.1} parent=1 // pred_check
      _
    $region27: #{tpu_custom_call.1} parent=1 // pred_check_branch
      %31 = sbr.rel (0) target = $region29
    $region28: #{tpu_custom_call.1} parent=1 // pred_region
      _
    $region29: #{tpu_custom_call.1} parent=1 // pred_fallthru
      _
    // Predicated region
    $region30: #{tpu_custom_call.1} parent=1 // pred_check
      _
    $region31: #{tpu_custom_call.1} parent=1 // pred_check_branch
      %33 = sbr.rel (0) target = $region33
    $region32: #{tpu_custom_call.1} parent=1 // pred_region
      _
    $region33: #{tpu_custom_call.1} parent=1 // pred_fallthru
      _
    // Predicated region
    $region34: #{tpu_custom_call.1} parent=1 // pred_check
      _
    $region35: #{tpu_custom_call.1} parent=1 // pred_check_branch
      %35 = sbr.rel (0) target = $region37
    $region36: #{tpu_custom_call.1} parent=1 // pred_region
      _
    $region37: #{tpu_custom_call.1} parent=1 // pred_fallthru
      _
    %v36 = vld [vmem:[%s0] sm:$0xff]
    %v37 = vld [vmem:[%s0 + $0x8] sm:$0xff]
    %v38 = vld [vmem:[%s0 + $0x10] sm:$0xff]
    %v39 = vld [vmem:[%s0 + $0x18] sm:$0xff]
    %v40 = vld [vmem:[%s3] sm:$0xff]
    %v41 = vld [vmem:[%s3 + $0x8] sm:$0xff]
    %v42 = vld [vmem:[%s3 + $0x10] sm:$0xff]
    %v43 = vld [vmem:[%s3 + $0x18] sm:$0xff]
    %v44 = vld [vmem:[%s4] sm:$0x1]
    %v46 = vlaneseq
    %v47 = vshrl.u32 %v46, 7
    %v48 = vsub.s32 0, %v47
    %v49 = vrot.slane %v44, %v48
    %vm51 = vcmask 261120
    %v53 = vsel %vm51, %v36, 0
    %v56 = vsel %vm51, %v37, 0
    %v59 = vsel %vm51, %v38, 0
    %v62 = vsel %vm51, %v39, 0
    %64 = vmatprep.subr.mxu0 0.0
    %65 = vmatpush1.msra.mxu0 0.0
    %66 = vmatprep.subr.mxu0 0.0
    %67 = vmatpush1.msra.mxu0 0.0
    %68 = vmatprep.subr.mxu0 0.0
    %69 = vmatpush1.msra.mxu0 0.0
    %70 = vmatprep.subr.mxu0 0.0
    %71 = vmatpush1.msra.mxu0 0.0
    %72 = vmatprep.subr.mxu0 0.0
    %73 = vmatpush1.msra.mxu0 0.0
    %74 = vmatprep.subr.mxu0 0.0
    %75 = vmatpush1.msra.mxu0 0.0
    %76 = vmatprep.subr.mxu0 0.0
    %77 = vmatpush1.msra.mxu0 0.0
    %78 = vmatprep.subr.mxu0 0.0
    %79 = vmatpush1.msra.mxu0 0.0
    %80 = vmatprep.subr.mxu0 0.0
    %81 = vmatpush1.msra.mxu0 0.0
    %82 = vmatprep.subr.mxu0 0.0
    %83 = vmatpush1.msra.mxu0 0.0
    %84 = vmatprep.subr.mxu0 0.0
    %85 = vmatpush1.msra.mxu0 0.0
    %86 = vmatprep.subr.mxu0 0.0
    %87 = vmatpush1.msra.mxu0 0.0
    %88 = vmatprep.subr.mxu0 0.0
    %89 = vmatpush1.msra.mxu0 %v43
    %90 = vmatprep.subr.mxu0 0.0
    %91 = vmatpush1.msra.mxu0 %v42
    %92 = vmatprep.subr.mxu0 0.0
    %93 = vmatpush1.msra.mxu0 %v41
    %94 = vmatprep.subr.mxu0 0.0
    %95 = vmatpush1.msra.mxu0 %v40
    %96 = vmatprep.subr.mxu0 0.0
    %97 = vmatpush2.msra.mxu0 0.0
    %98 = vmatprep.subr.mxu0 0.0
    %99 = vmatpush2.msra.mxu0 0.0
    %100 = vmatprep.subr.mxu0 0.0
    %101 = vmatpush2.msra.mxu0 0.0
    %102 = vmatprep.subr.mxu0 0.0
    %103 = vmatpush2.msra.mxu0 0.0
    %104 = vmatprep.subr.mxu0 0.0
    %105 = vmatpush2.msra.mxu0 0.0
    %106 = vmatprep.subr.mxu0 0.0
    %107 = vmatpush2.msra.mxu0 0.0
    %108 = vmatprep.subr.mxu0 0.0
    %109 = vmatpush2.msra.mxu0 0.0
    %110 = vmatprep.subr.mxu0 0.0
    %111 = vmatpush2.msra.mxu0 0.0
    %112 = vmatprep.subr.mxu0 0.0
    %113 = vmatpush2.msra.mxu0 0.0
    %114 = vmatprep.subr.mxu0 0.0
    %115 = vmatpush2.msra.mxu0 0.0
    %116 = vmatprep.subr.mxu0 0.0
    %117 = vmatpush2.msra.mxu0 0.0
    %118 = vmatprep.subr.mxu0 0.0
    %119 = vmatpush2.msra.mxu0 0.0
    %120 = vmatprep.subr.mxu0 0.0
    %121 = vmatpush2.msra.mxu0 0.0
    %122 = vmatprep.subr.mxu0 0.0
    %123 = vmatpush2.msra.mxu0 0.0
    %124 = vmatprep.subr.mxu0 0.0
    %125 = vmatpush2.msra.mxu0 0.0
    %126 = vmatprep.subr.mxu0 0.0
    %127 = vmatpush2.msra.mxu0 0.0
    %128 = vmatprep.mubr.f32.mxu0 0.0
    %129 = vmatmul.mubr.f32.gmra.mxu0 %v53
    %v130 = vpop.f32.mrf.mxu0
    %v131 = vadd.f32 %v49, %v130
    %v132 = vpop.f32.mrf.mxu0
    %133 = vmatprep.mubr.f32.mxu0 0.0
    %134 = vmatmul.mubr.f32.gmra.mxu0 %v56
    %v135 = vpop.f32.mrf.mxu0
    %v136 = vadd.f32 %v49, %v135
    %v137 = vpop.f32.mrf.mxu0
    %138 = vmatprep.mubr.f32.mxu0 0.0
    %139 = vmatmul.mubr.f32.gmra.mxu0 %v59
    %v140 = vpop.f32.mrf.mxu0
    %v141 = vadd.f32 %v49, %v140
    %v142 = vpop.f32.mrf.mxu0
    %143 = vmatprep.mubr.f32.mxu0 0.0
    %144 = vmatmul.mubr.f32.gmra.mxu0 %v62
    %v145 = vpop.f32.mrf.mxu0
    %v146 = vadd.f32 %v49, %v145
    %v147 = vpop.f32.mrf.mxu0
    %148 = vdwg.mxu0
    %v149 = vld [vmem:[%s1] sm:$0xff]
    %v150 = vld [vmem:[%s1 + $0x8] sm:$0xff]
    %v151 = vld [vmem:[%s1 + $0x10] sm:$0xff]
    %v152 = vld [vmem:[%s1 + $0x18] sm:$0xff]
    %v153 = vld [vmem:[%s1 + $0x20] sm:$0xff]
    %v154 = vld [vmem:[%s1 + $0x28] sm:$0xff]
    %v155 = vld [vmem:[%s1 + $0x30] sm:$0xff]
    %v156 = vld [vmem:[%s1 + $0x38] sm:$0xff]
    %v157 = vld [vmem:[%s5] sm:$0xff]
    %v158 = vld [vmem:[%s5 + $0x8] sm:$0xff]
    %v159 = vld [vmem:[%s5 + $0x10] sm:$0xff]
    %v160 = vld [vmem:[%s5 + $0x18] sm:$0xff]
    %v161 = vld [vmem:[%s6] sm:$0x1]
    %v163 = vlaneseq
    %v164 = vshrl.u32 %v163, 7
    %v165 = vsub.s32 0, %v164
    %v166 = vrot.slane %v161, %v165
    %v169 = vsel %vm51, %v149, 0
    %v172 = vsel %vm51, %v150, 0
    %v175 = vsel %vm51, %v151, 0
    %v178 = vsel %vm51, %v152, 0
    %v181 = vsel %vm51, %v153, 0
    %v184 = vsel %vm51, %v154, 0
    %v187 = vsel %vm51, %v155, 0
    %v190 = vsel %vm51, %v156, 0
    %192 = vmatprep.subr.mxu0 0.0
    %193 = vmatpush1.msra.mxu0 0.0
    %194 = vmatprep.subr.mxu0 0.0
    %195 = vmatpush1.msra.mxu0 0.0
    %196 = vmatprep.subr.mxu0 0.0
    %197 = vmatpush1.msra.mxu0 0.0
    %198 = vmatprep.subr.mxu0 0.0
    %199 = vmatpush1.msra.mxu0 0.0
    %200 = vmatprep.subr.mxu0 0.0
    %201 = vmatpush1.msra.mxu0 0.0
    %202 = vmatprep.subr.mxu0 0.0
    %203 = vmatpush1.msra.mxu0 0.0
    %204 = vmatprep.subr.mxu0 0.0
    %205 = vmatpush1.msra.mxu0 0.0
    %206 = vmatprep.subr.mxu0 0.0
    %207 = vmatpush1.msra.mxu0 0.0
    %208 = vmatprep.subr.mxu0 0.0
    %209 = vmatpush1.msra.mxu0 0.0
    %210 = vmatprep.subr.mxu0 0.0
    %211 = vmatpush1.msra.mxu0 0.0
    %212 = vmatprep.subr.mxu0 0.0
    %213 = vmatpush1.msra.mxu0 0.0
    %214 = vmatprep.subr.mxu0 0.0
    %215 = vmatpush1.msra.mxu0 0.0
    %216 = vmatprep.subr.mxu0 0.0
    %217 = vmatpush1.msra.mxu0 %v160
    %218 = vmatprep.subr.mxu0 0.0
    %219 = vmatpush1.msra.mxu0 %v159
    %220 = vmatprep.subr.mxu0 0.0
    %221 = vmatpush1.msra.mxu0 %v158
    %222 = vmatprep.subr.mxu0 0.0
    %223 = vmatpush1.msra.mxu0 %v157
    %224 = vmatprep.subr.mxu0 0.0
    %225 = vmatpush2.msra.mxu0 0.0
    %226 = vmatprep.subr.mxu0 0.0
    %227 = vmatpush2.msra.mxu0 0.0
    %228 = vmatprep.subr.mxu0 0.0
    %229 = vmatpush2.msra.mxu0 0.0
    %230 = vmatprep.subr.mxu0 0.0
    %231 = vmatpush2.msra.mxu0 0.0
    %232 = vmatprep.subr.mxu0 0.0
    %233 = vmatpush2.msra.mxu0 0.0
    %234 = vmatprep.subr.mxu0 0.0
    %235 = vmatpush2.msra.mxu0 0.0
    %236 = vmatprep.subr.mxu0 0.0
    %237 = vmatpush2.msra.mxu0 0.0
    %238 = vmatprep.subr.mxu0 0.0
    %239 = vmatpush2.msra.mxu0 0.0
    %240 = vmatprep.subr.mxu0 0.0
    %241 = vmatpush2.msra.mxu0 0.0
    %242 = vmatprep.subr.mxu0 0.0
    %243 = vmatpush2.msra.mxu0 0.0
    %244 = vmatprep.subr.mxu0 0.0
    %245 = vmatpush2.msra.mxu0 0.0
    %246 = vmatprep.subr.mxu0 0.0
    %247 = vmatpush2.msra.mxu0 0.0
    %248 = vmatprep.subr.mxu0 0.0
    %249 = vmatpush2.msra.mxu0 0.0
    %250 = vmatprep.subr.mxu0 0.0
    %251 = vmatpush2.msra.mxu0 0.0
    %252 = vmatprep.subr.mxu0 0.0
    %253 = vmatpush2.msra.mxu0 0.0
    %254 = vmatprep.subr.mxu0 0.0
    %255 = vmatpush2.msra.mxu0 0.0
    %256 = vmatprep.mubr.f32.mxu0 0.0
    %257 = vmatmul.mubr.f32.gmra.mxu0 %v169
    %v258 = vpop.f32.mrf.mxu0
    %v259 = vadd.f32 %v166, %v258
    %v260 = vpop.f32.mrf.mxu0
    %261 = vmatprep.mubr.f32.mxu0 0.0
    %262 = vmatmul.mubr.f32.gmra.mxu0 %v172
    %v263 = vpop.f32.mrf.mxu0
    %v264 = vadd.f32 %v166, %v263
    %v265 = vpop.f32.mrf.mxu0
    %266 = vmatprep.mubr.f32.mxu0 0.0
    %267 = vmatmul.mubr.f32.gmra.mxu0 %v175
    %v268 = vpop.f32.mrf.mxu0
    %v269 = vadd.f32 %v166, %v268
    %v270 = vpop.f32.mrf.mxu0
    %271 = vmatprep.mubr.f32.mxu0 0.0
    %272 = vmatmul.mubr.f32.gmra.mxu0 %v178
    %v273 = vpop.f32.mrf.mxu0
    %v274 = vadd.f32 %v166, %v273
    %v275 = vpop.f32.mrf.mxu0
    %276 = vmatprep.mubr.f32.mxu0 0.0
    %277 = vmatmul.mubr.f32.gmra.mxu0 %v181
    %v278 = vpop.f32.mrf.mxu0
    %v279 = vadd.f32 %v166, %v278
    %v280 = vpop.f32.mrf.mxu0
    %281 = vmatprep.mubr.f32.mxu0 0.0
    %282 = vmatmul.mubr.f32.gmra.mxu0 %v184
    %v283 = vpop.f32.mrf.mxu0
    %v284 = vadd.f32 %v166, %v283
    %v285 = vpop.f32.mrf.mxu0
    %286 = vmatprep.mubr.f32.mxu0 0.0
    %287 = vmatmul.mubr.f32.gmra.mxu0 %v187
    %v288 = vpop.f32.mrf.mxu0
    %v289 = vadd.f32 %v166, %v288
    %v290 = vpop.f32.mrf.mxu0
    %291 = vmatprep.mubr.f32.mxu0 0.0
    %292 = vmatmul.mubr.f32.gmra.mxu0 %v190
    %v293 = vpop.f32.mrf.mxu0
    %v294 = vadd.f32 %v166, %v293
    %v295 = vpop.f32.mrf.mxu0
    %296 = vdwg.mxu0
    %v297 = vld [vmem:[%s2] sm:$0xff]
    %v298 = vld [vmem:[%s2 + $0x8] sm:$0xff]
    %v299 = vld [vmem:[%s2 + $0x10] sm:$0xff]
    %v300 = vld [vmem:[%s2 + $0x18] sm:$0xff]
    %v301 = vld [vmem:[%s2 + $0x20] sm:$0xff]
    %v302 = vld [vmem:[%s2 + $0x28] sm:$0xff]
    %v303 = vld [vmem:[%s2 + $0x30] sm:$0xff]
    %v304 = vld [vmem:[%s2 + $0x38] sm:$0xff]
    %v305 = vld [vmem:[%s7] sm:$0xff]
    %v306 = vld [vmem:[%s7 + $0x8] sm:$0xff]
    %v307 = vld [vmem:[%s7 + $0x10] sm:$0xff]
    %v308 = vld [vmem:[%s7 + $0x18] sm:$0xff]
    %v309 = vld [vmem:[%s8] sm:$0x1]
    %v311 = vlaneseq
    %v312 = vshrl.u32 %v311, 7
    %v313 = vsub.s32 0, %v312
    %v314 = vrot.slane %v309, %v313
    %v317 = vsel %vm51, %v297, 0
    %v320 = vsel %vm51, %v298, 0
    %v323 = vsel %vm51, %v299, 0
    %v326 = vsel %vm51, %v300, 0
    %v329 = vsel %vm51, %v301, 0
    %v332 = vsel %vm51, %v302, 0
    %v335 = vsel %vm51, %v303, 0
    %v338 = vsel %vm51, %v304, 0
    %340 = vmatprep.subr.mxu0 0.0
    %341 = vmatpush1.msra.mxu0 0.0
    %342 = vmatprep.subr.mxu0 0.0
    %343 = vmatpush1.msra.mxu0 0.0
    %344 = vmatprep.subr.mxu0 0.0
    %345 = vmatpush1.msra.mxu0 0.0
    %346 = vmatprep.subr.mxu0 0.0
    %347 = vmatpush1.msra.mxu0 0.0
    %348 = vmatprep.subr.mxu0 0.0
    %349 = vmatpush1.msra.mxu0 0.0
    %350 = vmatprep.subr.mxu0 0.0
    %351 = vmatpush1.msra.mxu0 0.0
    %352 = vmatprep.subr.mxu0 0.0
    %353 = vmatpush1.msra.mxu0 0.0
    %354 = vmatprep.subr.mxu0 0.0
    %355 = vmatpush1.msra.mxu0 0.0
    %356 = vmatprep.subr.mxu0 0.0
    %357 = vmatpush1.msra.mxu0 0.0
    %358 = vmatprep.subr.mxu0 0.0
    %359 = vmatpush1.msra.mxu0 0.0
    %360 = vmatprep.subr.mxu0 0.0
    %361 = vmatpush1.msra.mxu0 0.0
    %362 = vmatprep.subr.mxu0 0.0
    %363 = vmatpush1.msra.mxu0 0.0
    %364 = vmatprep.subr.mxu0 0.0
    %365 = vmatpush1.msra.mxu0 %v308
    %366 = vmatprep.subr.mxu0 0.0
    %367 = vmatpush1.msra.mxu0 %v307
    %368 = vmatprep.subr.mxu0 0.0
    %369 = vmatpush1.msra.mxu0 %v306
    %370 = vmatprep.subr.mxu0 0.0
    %371 = vmatpush1.msra.mxu0 %v305
    %372 = vmatprep.subr.mxu0 0.0
    %373 = vmatpush2.msra.mxu0 0.0
    %374 = vmatprep.subr.mxu0 0.0
    %375 = vmatpush2.msra.mxu0 0.0
    %376 = vmatprep.subr.mxu0 0.0
    %377 = vmatpush2.msra.mxu0 0.0
    %378 = vmatprep.subr.mxu0 0.0
    %379 = vmatpush2.msra.mxu0 0.0
    %380 = vmatprep.subr.mxu0 0.0
    %381 = vmatpush2.msra.mxu0 0.0
    %382 = vmatprep.subr.mxu0 0.0
    %383 = vmatpush2.msra.mxu0 0.0
    %384 = vmatprep.subr.mxu0 0.0
    %385 = vmatpush2.msra.mxu0 0.0
    %386 = vmatprep.subr.mxu0 0.0
    %387 = vmatpush2.msra.mxu0 0.0
    %388 = vmatprep.subr.mxu0 0.0
    %389 = vmatpush2.msra.mxu0 0.0
    %390 = vmatprep.subr.mxu0 0.0
    %391 = vmatpush2.msra.mxu0 0.0
    %392 = vmatprep.subr.mxu0 0.0
    %393 = vmatpush2.msra.mxu0 0.0
    %394 = vmatprep.subr.mxu0 0.0
    %395 = vmatpush2.msra.mxu0 0.0
    %396 = vmatprep.subr.mxu0 0.0
    %397 = vmatpush2.msra.mxu0 0.0
    %398 = vmatprep.subr.mxu0 0.0
    %399 = vmatpush2.msra.mxu0 0.0
    %400 = vmatprep.subr.mxu0 0.0
    %401 = vmatpush2.msra.mxu0 0.0
    %402 = vmatprep.subr.mxu0 0.0
    %403 = vmatpush2.msra.mxu0 0.0
    %404 = vmatprep.mubr.f32.mxu0 0.0
    %405 = vmatmul.mubr.f32.gmra.mxu0 %v317
    %v406 = vpop.f32.mrf.mxu0
    %v407 = vadd.f32 %v314, %v406
    %v408 = vpop.f32.mrf.mxu0
    %409 = vmatprep.mubr.f32.mxu0 0.0
    %410 = vmatmul.mubr.f32.gmra.mxu0 %v320
    %v411 = vpop.f32.mrf.mxu0
    %v412 = vadd.f32 %v314, %v411
    %v413 = vpop.f32.mrf.mxu0
    %414 = vmatprep.mubr.f32.mxu0 0.0
    %415 = vmatmul.mubr.f32.gmra.mxu0 %v323
    %v416 = vpop.f32.mrf.mxu0
    %v417 = vadd.f32 %v314, %v416
    %v418 = vpop.f32.mrf.mxu0
    %419 = vmatprep.mubr.f32.mxu0 0.0
    %420 = vmatmul.mubr.f32.gmra.mxu0 %v326
    %v421 = vpop.f32.mrf.mxu0
    %v422 = vadd.f32 %v314, %v421
    %v423 = vpop.f32.mrf.mxu0
    %424 = vmatprep.mubr.f32.mxu0 0.0
    %425 = vmatmul.mubr.f32.gmra.mxu0 %v329
    %v426 = vpop.f32.mrf.mxu0
    %v427 = vadd.f32 %v314, %v426
    %v428 = vpop.f32.mrf.mxu0
    %429 = vmatprep.mubr.f32.mxu0 0.0
    %430 = vmatmul.mubr.f32.gmra.mxu0 %v332
    %v431 = vpop.f32.mrf.mxu0
    %v432 = vadd.f32 %v314, %v431
    %v433 = vpop.f32.mrf.mxu0
    %434 = vmatprep.mubr.f32.mxu0 0.0
    %435 = vmatmul.mubr.f32.gmra.mxu0 %v335
    %v436 = vpop.f32.mrf.mxu0
    %v437 = vadd.f32 %v314, %v436
    %v438 = vpop.f32.mrf.mxu0
    %439 = vmatprep.mubr.f32.mxu0 0.0
    %440 = vmatmul.mubr.f32.gmra.mxu0 %v338
    %v441 = vpop.f32.mrf.mxu0
    %v442 = vadd.f32 %v314, %v441
    %v443 = vpop.f32.mrf.mxu0
    %444 = vdwg.mxu0
    %v446 = vsel %vm51, %v131, 0
    %v449 = vsel %vm51, %v259, 0
    %v452 = vsel %vm51, %v264, 0
    %454 = vmatprep.subr.mxu0 0.0
    %455 = vmatpush1.xpose.msra.mxu0 0.0
    %456 = vmatprep.subr.mxu0 0.0
    %457 = vmatpush1.xpose.msra.mxu0 0.0
    %458 = vmatprep.subr.mxu0 0.0
    %459 = vmatpush1.xpose.msra.mxu0 0.0
    %460 = vmatprep.subr.mxu0 0.0
    %461 = vmatpush1.xpose.msra.mxu0 0.0
    %462 = vmatprep.subr.mxu0 0.0
    %463 = vmatpush1.xpose.msra.mxu0 0.0
    %464 = vmatprep.subr.mxu0 0.0
    %465 = vmatpush1.xpose.msra.mxu0 0.0
    %466 = vmatprep.subr.mxu0 0.0
    %467 = vmatpush1.xpose.msra.mxu0 0.0
    %468 = vmatprep.subr.mxu0 0.0
    %469 = vmatpush1.xpose.msra.mxu0 0.0
    %470 = vmatprep.subr.mxu0 0.0
    %471 = vmatpush1.xpose.msra.mxu0 0.0
    %472 = vmatprep.subr.mxu0 0.0
    %473 = vmatpush1.xpose.msra.mxu0 0.0
    %474 = vmatprep.subr.mxu0 0.0
    %475 = vmatpush1.xpose.msra.mxu0 0.0
    %476 = vmatprep.subr.mxu0 0.0
    %477 = vmatpush1.xpose.msra.mxu0 0.0
    %478 = vmatprep.subr.mxu0 0.0
    %479 = vmatpush1.xpose.msra.mxu0 0.0
    %480 = vmatprep.subr.mxu0 0.0
    %481 = vmatpush1.xpose.msra.mxu0 0.0
    %482 = vmatprep.subr.mxu0 0.0
    %483 = vmatpush1.xpose.msra.mxu0 %v452
    %484 = vmatprep.subr.mxu0 0.0
    %485 = vmatpush1.xpose.msra.mxu0 %v449
    %486 = vmatprep.subr.mxu0 0.0
    %487 = vmatpush2.xpose.msra.mxu0 0.0
    %488 = vmatprep.subr.mxu0 0.0
    %489 = vmatpush2.xpose.msra.mxu0 0.0
    %490 = vmatprep.subr.mxu0 0.0
    %491 = vmatpush2.xpose.msra.mxu0 0.0
    %492 = vmatprep.subr.mxu0 0.0
    %493 = vmatpush2.xpose.msra.mxu0 0.0
    %494 = vmatprep.subr.mxu0 0.0
    %495 = vmatpush2.xpose.msra.mxu0 0.0
    %496 = vmatprep.subr.mxu0 0.0
    %497 = vmatpush2.xpose.msra.mxu0 0.0
    %498 = vmatprep.subr.mxu0 0.0
    %499 = vmatpush2.xpose.msra.mxu0 0.0
    %500 = vmatprep.subr.mxu0 0.0
    %501 = vmatpush2.xpose.msra.mxu0 0.0
    %502 = vmatprep.subr.mxu0 0.0
    %503 = vmatpush2.xpose.msra.mxu0 0.0
    %504 = vmatprep.subr.mxu0 0.0
    %505 = vmatpush2.xpose.msra.mxu0 0.0
    %506 = vmatprep.subr.mxu0 0.0
    %507 = vmatpush2.xpose.msra.mxu0 0.0
    %508 = vmatprep.subr.mxu0 0.0
    %509 = vmatpush2.xpose.msra.mxu0 0.0
    %510 = vmatprep.subr.mxu0 0.0
    %511 = vmatpush2.xpose.msra.mxu0 0.0
    %512 = vmatprep.subr.mxu0 0.0
    %513 = vmatpush2.xpose.msra.mxu0 0.0
    %514 = vmatprep.subr.mxu0 0.0
    %515 = vmatpush2.xpose.msra.mxu0 0.0
    %516 = vmatprep.subr.mxu0 0.0
    %517 = vmatpush2.xpose.msra.mxu0 0.0
    %518 = vmatprep.mubr.f32.mxu0 0.0
    %519 = vmatmul.mubr.f32.gmra.mxu0 %v446
    %v520 = vpop.f32.mrf.mxu0
    %v521 = vadd.f32 0.0, %v520
    %v522 = vpop.f32.mrf.mxu0
    %523 = vdwg.mxu0
    %v525 = vsel %vm51, %v136, 0
    %v528 = vsel %vm51, %v269, 0
    %v531 = vsel %vm51, %v274, 0
    %533 = vmatprep.subr.mxu0 0.0
    %534 = vmatpush1.xpose.msra.mxu0 0.0
    %535 = vmatprep.subr.mxu0 0.0
    %536 = vmatpush1.xpose.msra.mxu0 0.0
    %537 = vmatprep.subr.mxu0 0.0
    %538 = vmatpush1.xpose.msra.mxu0 0.0
    %539 = vmatprep.subr.mxu0 0.0
    %540 = vmatpush1.xpose.msra.mxu0 0.0
    %541 = vmatprep.subr.mxu0 0.0
    %542 = vmatpush1.xpose.msra.mxu0 0.0
    %543 = vmatprep.subr.mxu0 0.0
    %544 = vmatpush1.xpose.msra.mxu0 0.0
    %545 = vmatprep.subr.mxu0 0.0
    %546 = vmatpush1.xpose.msra.mxu0 0.0
    %547 = vmatprep.subr.mxu0 0.0
    %548 = vmatpush1.xpose.msra.mxu0 0.0
    %549 = vmatprep.subr.mxu0 0.0
    %550 = vmatpush1.xpose.msra.mxu0 0.0
    %551 = vmatprep.subr.mxu0 0.0
    %552 = vmatpush1.xpose.msra.mxu0 0.0
    %553 = vmatprep.subr.mxu0 0.0
    %554 = vmatpush1.xpose.msra.mxu0 0.0
    %555 = vmatprep.subr.mxu0 0.0
    %556 = vmatpush1.xpose.msra.mxu0 0.0
    %557 = vmatprep.subr.mxu0 0.0
    %558 = vmatpush1.xpose.msra.mxu0 0.0
    %559 = vmatprep.subr.mxu0 0.0
    %560 = vmatpush1.xpose.msra.mxu0 0.0
    %561 = vmatprep.subr.mxu0 0.0
    %562 = vmatpush1.xpose.msra.mxu0 %v531
    %563 = vmatprep.subr.mxu0 0.0
    %564 = vmatpush1.xpose.msra.mxu0 %v528
    %565 = vmatprep.subr.mxu0 0.0
    %566 = vmatpush2.xpose.msra.mxu0 0.0
    %567 = vmatprep.subr.mxu0 0.0
    %568 = vmatpush2.xpose.msra.mxu0 0.0
    %569 = vmatprep.subr.mxu0 0.0
    %570 = vmatpush2.xpose.msra.mxu0 0.0
    %571 = vmatprep.subr.mxu0 0.0
    %572 = vmatpush2.xpose.msra.mxu0 0.0
    %573 = vmatprep.subr.mxu0 0.0
    %574 = vmatpush2.xpose.msra.mxu0 0.0
    %575 = vmatprep.subr.mxu0 0.0
    %576 = vmatpush2.xpose.msra.mxu0 0.0
    %577 = vmatprep.subr.mxu0 0.0
    %578 = vmatpush2.xpose.msra.mxu0 0.0
    %579 = vmatprep.subr.mxu0 0.0
    %580 = vmatpush2.xpose.msra.mxu0 0.0
    %581 = vmatprep.subr.mxu0 0.0
    %582 = vmatpush2.xpose.msra.mxu0 0.0
    %583 = vmatprep.subr.mxu0 0.0
    %584 = vmatpush2.xpose.msra.mxu0 0.0
    %585 = vmatprep.subr.mxu0 0.0
    %586 = vmatpush2.xpose.msra.mxu0 0.0
    %587 = vmatprep.subr.mxu0 0.0
    %588 = vmatpush2.xpose.msra.mxu0 0.0
    %589 = vmatprep.subr.mxu0 0.0
    %590 = vmatpush2.xpose.msra.mxu0 0.0
    %591 = vmatprep.subr.mxu0 0.0
    %592 = vmatpush2.xpose.msra.mxu0 0.0
    %593 = vmatprep.subr.mxu0 0.0
    %594 = vmatpush2.xpose.msra.mxu0 0.0
    %595 = vmatprep.subr.mxu0 0.0
    %596 = vmatpush2.xpose.msra.mxu0 0.0
    %597 = vmatprep.mubr.f32.mxu0 0.0
    %598 = vmatmul.mubr.f32.gmra.mxu0 %v525
    %v599 = vpop.f32.mrf.mxu0
    %v600 = vadd.f32 0.0, %v599
    %v601 = vpop.f32.mrf.mxu0
    %602 = vdwg.mxu0
    %v604 = vsel %vm51, %v141, 0
    %v607 = vsel %vm51, %v279, 0
    %v610 = vsel %vm51, %v284, 0
    %612 = vmatprep.subr.mxu0 0.0
    %613 = vmatpush1.xpose.msra.mxu0 0.0
    %614 = vmatprep.subr.mxu0 0.0
    %615 = vmatpush1.xpose.msra.mxu0 0.0
    %616 = vmatprep.subr.mxu0 0.0
    %617 = vmatpush1.xpose.msra.mxu0 0.0
    %618 = vmatprep.subr.mxu0 0.0
    %619 = vmatpush1.xpose.msra.mxu0 0.0
    %620 = vmatprep.subr.mxu0 0.0
    %621 = vmatpush1.xpose.msra.mxu0 0.0
    %622 = vmatprep.subr.mxu0 0.0
    %623 = vmatpush1.xpose.msra.mxu0 0.0
    %624 = vmatprep.subr.mxu0 0.0
    %625 = vmatpush1.xpose.msra.mxu0 0.0
    %626 = vmatprep.subr.mxu0 0.0
    %627 = vmatpush1.xpose.msra.mxu0 0.0
    %628 = vmatprep.subr.mxu0 0.0
    %629 = vmatpush1.xpose.msra.mxu0 0.0
    %630 = vmatprep.subr.mxu0 0.0
    %631 = vmatpush1.xpose.msra.mxu0 0.0
    %632 = vmatprep.subr.mxu0 0.0
    %633 = vmatpush1.xpose.msra.mxu0 0.0
    %634 = vmatprep.subr.mxu0 0.0
    %635 = vmatpush1.xpose.msra.mxu0 0.0
    %636 = vmatprep.subr.mxu0 0.0
    %637 = vmatpush1.xpose.msra.mxu0 0.0
    %638 = vmatprep.subr.mxu0 0.0
    %639 = vmatpush1.xpose.msra.mxu0 0.0
    %640 = vmatprep.subr.mxu0 0.0
    %641 = vmatpush1.xpose.msra.mxu0 %v610
    %642 = vmatprep.subr.mxu0 0.0
    %643 = vmatpush1.xpose.msra.mxu0 %v607
    %644 = vmatprep.subr.mxu0 0.0
    %645 = vmatpush2.xpose.msra.mxu0 0.0
    %646 = vmatprep.subr.mxu0 0.0
    %647 = vmatpush2.xpose.msra.mxu0 0.0
    %648 = vmatprep.subr.mxu0 0.0
    %649 = vmatpush2.xpose.msra.mxu0 0.0
    %650 = vmatprep.subr.mxu0 0.0
    %651 = vmatpush2.xpose.msra.mxu0 0.0
    %652 = vmatprep.subr.mxu0 0.0
    %653 = vmatpush2.xpose.msra.mxu0 0.0
    %654 = vmatprep.subr.mxu0 0.0
    %655 = vmatpush2.xpose.msra.mxu0 0.0
    %656 = vmatprep.subr.mxu0 0.0
    %657 = vmatpush2.xpose.msra.mxu0 0.0
    %658 = vmatprep.subr.mxu0 0.0
    %659 = vmatpush2.xpose.msra.mxu0 0.0
    %660 = vmatprep.subr.mxu0 0.0
    %661 = vmatpush2.xpose.msra.mxu0 0.0
    %662 = vmatprep.subr.mxu0 0.0
    %663 = vmatpush2.xpose.msra.mxu0 0.0
    %664 = vmatprep.subr.mxu0 0.0
    %665 = vmatpush2.xpose.msra.mxu0 0.0
    %666 = vmatprep.subr.mxu0 0.0
    %667 = vmatpush2.xpose.msra.mxu0 0.0
    %668 = vmatprep.subr.mxu0 0.0
    %669 = vmatpush2.xpose.msra.mxu0 0.0
    %670 = vmatprep.subr.mxu0 0.0
    %671 = vmatpush2.xpose.msra.mxu0 0.0
    %672 = vmatprep.subr.mxu0 0.0
    %673 = vmatpush2.xpose.msra.mxu0 0.0
    %674 = vmatprep.subr.mxu0 0.0
    %675 = vmatpush2.xpose.msra.mxu0 0.0
    %676 = vmatprep.mubr.f32.mxu0 0.0
    %677 = vmatmul.mubr.f32.gmra.mxu0 %v604
    %v678 = vpop.f32.mrf.mxu0
    %v679 = vadd.f32 0.0, %v678
    %v680 = vpop.f32.mrf.mxu0
    %681 = vdwg.mxu0
    %v683 = vsel %vm51, %v146, 0
    %v686 = vsel %vm51, %v289, 0
    %v689 = vsel %vm51, %v294, 0
    %691 = vmatprep.subr.mxu0 0.0
    %692 = vmatpush1.xpose.msra.mxu0 0.0
    %693 = vmatprep.subr.mxu0 0.0
    %694 = vmatpush1.xpose.msra.mxu0 0.0
    %695 = vmatprep.subr.mxu0 0.0
    %696 = vmatpush1.xpose.msra.mxu0 0.0
    %697 = vmatprep.subr.mxu0 0.0
    %698 = vmatpush1.xpose.msra.mxu0 0.0
    %699 = vmatprep.subr.mxu0 0.0
    %700 = vmatpush1.xpose.msra.mxu0 0.0
    %701 = vmatprep.subr.mxu0 0.0
    %702 = vmatpush1.xpose.msra.mxu0 0.0
    %703 = vmatprep.subr.mxu0 0.0
    %704 = vmatpush1.xpose.msra.mxu0 0.0
    %705 = vmatprep.subr.mxu0 0.0
    %706 = vmatpush1.xpose.msra.mxu0 0.0
    %707 = vmatprep.subr.mxu0 0.0
    %708 = vmatpush1.xpose.msra.mxu0 0.0
    %709 = vmatprep.subr.mxu0 0.0
    %710 = vmatpush1.xpose.msra.mxu0 0.0
    %711 = vmatprep.subr.mxu0 0.0
    %712 = vmatpush1.xpose.msra.mxu0 0.0
    %713 = vmatprep.subr.mxu0 0.0
    %714 = vmatpush1.xpose.msra.mxu0 0.0
    %715 = vmatprep.subr.mxu0 0.0
    %716 = vmatpush1.xpose.msra.mxu0 0.0
    %717 = vmatprep.subr.mxu0 0.0
    %718 = vmatpush1.xpose.msra.mxu0 0.0
    %719 = vmatprep.subr.mxu0 0.0
    %720 = vmatpush1.xpose.msra.mxu0 %v689
    %721 = vmatprep.subr.mxu0 0.0
    %722 = vmatpush1.xpose.msra.mxu0 %v686
    %723 = vmatprep.subr.mxu0 0.0
    %724 = vmatpush2.xpose.msra.mxu0 0.0
    %725 = vmatprep.subr.mxu0 0.0
    %726 = vmatpush2.xpose.msra.mxu0 0.0
    %727 = vmatprep.subr.mxu0 0.0
    %728 = vmatpush2.xpose.msra.mxu0 0.0
    %729 = vmatprep.subr.mxu0 0.0
    %730 = vmatpush2.xpose.msra.mxu0 0.0
    %731 = vmatprep.subr.mxu0 0.0
    %732 = vmatpush2.xpose.msra.mxu0 0.0
    %733 = vmatprep.subr.mxu0 0.0
    %734 = vmatpush2.xpose.msra.mxu0 0.0
    %735 = vmatprep.subr.mxu0 0.0
    %736 = vmatpush2.xpose.msra.mxu0 0.0
    %737 = vmatprep.subr.mxu0 0.0
    %738 = vmatpush2.xpose.msra.mxu0 0.0
    %739 = vmatprep.subr.mxu0 0.0
    %740 = vmatpush2.xpose.msra.mxu0 0.0
    %741 = vmatprep.subr.mxu0 0.0
    %742 = vmatpush2.xpose.msra.mxu0 0.0
    %743 = vmatprep.subr.mxu0 0.0
    %744 = vmatpush2.xpose.msra.mxu0 0.0
    %745 = vmatprep.subr.mxu0 0.0
    %746 = vmatpush2.xpose.msra.mxu0 0.0
    %747 = vmatprep.subr.mxu0 0.0
    %748 = vmatpush2.xpose.msra.mxu0 0.0
    %749 = vmatprep.subr.mxu0 0.0
    %750 = vmatpush2.xpose.msra.mxu0 0.0
    %751 = vmatprep.subr.mxu0 0.0
    %752 = vmatpush2.xpose.msra.mxu0 0.0
    %753 = vmatprep.subr.mxu0 0.0
    %754 = vmatpush2.xpose.msra.mxu0 0.0
    %755 = vmatprep.mubr.f32.mxu0 0.0
    %756 = vmatmul.mubr.f32.gmra.mxu0 %v683
    %v757 = vpop.f32.mrf.mxu0
    %v758 = vadd.f32 0.0, %v757
    %v759 = vpop.f32.mrf.mxu0
    %760 = vdwg.mxu0
    %vm761 = vcmask 130048
    %v762 = vsel %vm761, %v521, -inf
    %763 = vmax.xlane.f32.xlu0 %v762
    %v764 = vpop.xlane.xlu0 %763
    %v765 = vsel %vm761, %v600, -inf
    %766 = vmax.xlane.f32.xlu0 %v765
    %v767 = vpop.xlane.xlu0 %766
    %v768 = vsel %vm761, %v679, -inf
    %769 = vmax.xlane.f32.xlu0 %v768
    %v770 = vpop.xlane.xlu0 %769
    %v771 = vsel %vm761, %v758, -inf
    %772 = vmax.xlane.f32.xlu0 %v771
    %v773 = vpop.xlane.xlu0 %772
    %v774 = vlaneseq
    %v775 = vand.u32 %v774, 127
    %vm776 = vcmp.eq.f32.partialorder %v521, %v764
    %vm777 = vcmp.eq.f32.partialorder %v600, %v767
    %vm778 = vcmp.eq.f32.partialorder %v679, %v770
    %vm779 = vcmp.eq.f32.partialorder %v758, %v773
    %v780 = vsel %vm776, %v775, 2147483647
    %v781 = vsel %vm777, %v775, 2147483647
    %v782 = vsel %vm778, %v775, 2147483647
    %v783 = vsel %vm779, %v775, 2147483647
    %v784 = vsel %vm761, %v780, 2147483647
    %v785 = vand.u32 %v784, 65535
    %v786 = vshra.s32 %v784, 16
    %v787 = vcvt.s32.f32 %v785
    %v788 = vcvt.s32.f32 %v786
    %789 = vmin.xlane.f32.xlu0 %v788
    %v790 = vpop.xlane.xlu0 %789
    %vm791 = vcmp.eq.f32.partialorder %v788, %v790
    %v792 = vsel %vm791, %v787, inf
    %793 = vmin.xlane.f32.xlu0 %v792
    %v794 = vpop.xlane.xlu0 %793
    %v795 = vcvt.f32.s32 %v794
    %v796 = vcvt.f32.s32 %v790
    %v797 = vshll.u32 %v796, 16
    %v798 = vadd.s32 %v797, %v795
    %v799 = vsel %vm761, %v781, 2147483647
    %v800 = vand.u32 %v799, 65535
    %v801 = vshra.s32 %v799, 16
    %v802 = vcvt.s32.f32 %v800
    %v803 = vcvt.s32.f32 %v801
    %804 = vmin.xlane.f32.xlu0 %v803
    %v805 = vpop.xlane.xlu0 %804
    %vm806 = vcmp.eq.f32.partialorder %v803, %v805
    %v807 = vsel %vm806, %v802, inf
    %808 = vmin.xlane.f32.xlu0 %v807
    %v809 = vpop.xlane.xlu0 %808
    %v810 = vcvt.f32.s32 %v809
    %v811 = vcvt.f32.s32 %v805
    %v812 = vshll.u32 %v811, 16
    %v813 = vadd.s32 %v812, %v810
    %v814 = vsel %vm761, %v782, 2147483647
    %v815 = vand.u32 %v814, 65535
    %v816 = vshra.s32 %v814, 16
    %v817 = vcvt.s32.f32 %v815
    %v818 = vcvt.s32.f32 %v816
    %819 = vmin.xlane.f32.xlu0 %v818
    %v820 = vpop.xlane.xlu0 %819
    %vm821 = vcmp.eq.f32.partialorder %v818, %v820
    %v822 = vsel %vm821, %v817, inf
    %823 = vmin.xlane.f32.xlu0 %v822
    %v824 = vpop.xlane.xlu0 %823
    %v825 = vcvt.f32.s32 %v824
    %v826 = vcvt.f32.s32 %v820
    %v827 = vshll.u32 %v826, 16
    %v828 = vadd.s32 %v827, %v825
    %v829 = vsel %vm761, %v783, 2147483647
    %v830 = vand.u32 %v829, 65535
    %v831 = vshra.s32 %v829, 16
    %v832 = vcvt.s32.f32 %v830
    %v833 = vcvt.s32.f32 %v831
    %834 = vmin.xlane.f32.xlu0 %v833
    %v835 = vpop.xlane.xlu0 %834
    %vm836 = vcmp.eq.f32.partialorder %v833, %v835
    %v837 = vsel %vm836, %v832, inf
    %838 = vmin.xlane.f32.xlu0 %v837
    %v839 = vpop.xlane.xlu0 %838
    %v840 = vcvt.f32.s32 %v839
    %v841 = vcvt.f32.s32 %v835
    %v842 = vshll.u32 %v841, 16
    %v843 = vadd.s32 %v842, %v840
    %v844 = vlaneseq
    %v845 = vshrl.u32 %v844, 7
    %v846 = vsub.s32 %v775, %v845
    %v847 = vrot.slane %v798, %v846
    %v848 = vlaneseq
    %v849 = vshrl.u32 %v848, 7
    %v850 = vsub.s32 %v775, %v849
    %v851 = vrot.slane %v813, %v850
    %v852 = vlaneseq
    %v853 = vshrl.u32 %v852, 7
    %v854 = vsub.s32 %v775, %v853
    %v855 = vrot.slane %v828, %v854
    %v856 = vlaneseq
    %v857 = vshrl.u32 %v856, 7
    %v858 = vsub.s32 %v775, %v857
    %v859 = vrot.slane %v843, %v858
    %vm860 = vcmask 1041409
    %v861 = vsel %vm860, %v851, %v847
    %vm862 = vcmask 1042434
    %v863 = vsel %vm862, %v855, %v861
    %vm864 = vcmask 1043459
    %v865 = vsel %vm864, %v859, %v863
    %vm866 = vcmask 60416
    %867 = vst.msk [vmem:[#allocation4] sm:$0xf] %vm866, %v865
    %v868 = vsub.f32 %v521, %v764
    %v869 = vsub.f32 %v600, %v767
    %v870 = vsub.f32 %v679, %v770
    %v871 = vsub.f32 %v758, %v773
    %v872 = vmul.f32 %v868, 1.442695
    %v873 = vpow.pop %v872
    %v874 = vmul.f32 %v869, 1.442695
    %v875 = vpow.pop %v874
    %v876 = vmul.f32 %v870, 1.442695
    %v877 = vpow.pop %v876
    %v878 = vmul.f32 %v871, 1.442695
    %v879 = vpow.pop %v878
    %v880 = vsel %vm761, %v873, 0.0
    %881 = vadd.xlane.f32.xlu0 %v880
    %v882 = vpop.xlane.xlu0 %881
    %v883 = vsel %vm761, %v875, 0.0
    %884 = vadd.xlane.f32.xlu0 %v883
    %v885 = vpop.xlane.xlu0 %884
    %v886 = vsel %vm761, %v877, 0.0
    %887 = vadd.xlane.f32.xlu0 %v886
    %v888 = vpop.xlane.xlu0 %887
    %v889 = vsel %vm761, %v879, 0.0
    %890 = vadd.xlane.f32.xlu0 %v889
    %v891 = vpop.xlane.xlu0 %890
    %v893 = vsel %vm761, %v873, 0
    %895 = vmatprep.subr.mxu0 0.0
    %896 = vmatpush1.msra.mxu0 0.0
    %897 = vmatprep.subr.mxu0 0.0
    %898 = vmatpush1.msra.mxu0 0.0
    %899 = vmatprep.subr.mxu0 0.0
    %900 = vmatpush1.msra.mxu0 0.0
    %901 = vmatprep.subr.mxu0 0.0
    %902 = vmatpush1.msra.mxu0 0.0
    %903 = vmatprep.subr.mxu0 0.0
    %904 = vmatpush1.msra.mxu0 0.0
    %905 = vmatprep.subr.mxu0 0.0
    %906 = vmatpush1.msra.mxu0 0.0
    %907 = vmatprep.subr.mxu0 0.0
    %908 = vmatpush1.msra.mxu0 0.0
    %909 = vmatprep.subr.mxu0 0.0
    %910 = vmatpush1.msra.mxu0 0.0
    %911 = vmatprep.subr.mxu0 0.0
    %912 = vmatpush1.msra.mxu0 0.0
    %913 = vmatprep.subr.mxu0 0.0
    %914 = vmatpush1.msra.mxu0 0.0
    %915 = vmatprep.subr.mxu0 0.0
    %916 = vmatpush1.msra.mxu0 0.0
    %917 = vmatprep.subr.mxu0 0.0
    %918 = vmatpush1.msra.mxu0 0.0
    %919 = vmatprep.subr.mxu0 0.0
    %920 = vmatpush1.msra.mxu0 0.0
    %921 = vmatprep.subr.mxu0 0.0
    %922 = vmatpush1.msra.mxu0 0.0
    %923 = vmatprep.subr.mxu0 0.0
    %924 = vmatpush1.msra.mxu0 %v412
    %925 = vmatprep.subr.mxu0 0.0
    %926 = vmatpush1.msra.mxu0 %v407
    %927 = vmatprep.subr.mxu0 0.0
    %928 = vmatpush2.msra.mxu0 0.0
    %929 = vmatprep.subr.mxu0 0.0
    %930 = vmatpush2.msra.mxu0 0.0
    %931 = vmatprep.subr.mxu0 0.0
    %932 = vmatpush2.msra.mxu0 0.0
    %933 = vmatprep.subr.mxu0 0.0
    %934 = vmatpush2.msra.mxu0 0.0
    %935 = vmatprep.subr.mxu0 0.0
    %936 = vmatpush2.msra.mxu0 0.0
    %937 = vmatprep.subr.mxu0 0.0
    %938 = vmatpush2.msra.mxu0 0.0
    %939 = vmatprep.subr.mxu0 0.0
    %940 = vmatpush2.msra.mxu0 0.0
    %941 = vmatprep.subr.mxu0 0.0
    %942 = vmatpush2.msra.mxu0 0.0
    %943 = vmatprep.subr.mxu0 0.0
    %944 = vmatpush2.msra.mxu0 0.0
    %945 = vmatprep.subr.mxu0 0.0
    %946 = vmatpush2.msra.mxu0 0.0
    %947 = vmatprep.subr.mxu0 0.0
    %948 = vmatpush2.msra.mxu0 0.0
    %949 = vmatprep.subr.mxu0 0.0
    %950 = vmatpush2.msra.mxu0 0.0
    %951 = vmatprep.subr.mxu0 0.0
    %952 = vmatpush2.msra.mxu0 0.0
    %953 = vmatprep.subr.mxu0 0.0
    %954 = vmatpush2.msra.mxu0 0.0
    %955 = vmatprep.subr.mxu0 0.0
    %956 = vmatpush2.msra.mxu0 0.0
    %957 = vmatprep.subr.mxu0 0.0
    %958 = vmatpush2.msra.mxu0 0.0
    %959 = vmatprep.mubr.f32.mxu0 0.0
    %960 = vmatmul.mubr.f32.gmra.mxu0 %v893
    %v961 = vpop.f32.mrf.mxu0
    %v962 = vadd.f32 0.0, %v961
    %v963 = vpop.f32.mrf.mxu0
    %964 = vdwg.mxu0
    %v966 = vsel %vm761, %v875, 0
    %968 = vmatprep.subr.mxu0 0.0
    %969 = vmatpush1.msra.mxu0 0.0
    %970 = vmatprep.subr.mxu0 0.0
    %971 = vmatpush1.msra.mxu0 0.0
    %972 = vmatprep.subr.mxu0 0.0
    %973 = vmatpush1.msra.mxu0 0.0
    %974 = vmatprep.subr.mxu0 0.0
    %975 = vmatpush1.msra.mxu0 0.0
    %976 = vmatprep.subr.mxu0 0.0
    %977 = vmatpush1.msra.mxu0 0.0
    %978 = vmatprep.subr.mxu0 0.0
    %979 = vmatpush1.msra.mxu0 0.0
    %980 = vmatprep.subr.mxu0 0.0
    %981 = vmatpush1.msra.mxu0 0.0
    %982 = vmatprep.subr.mxu0 0.0
    %983 = vmatpush1.msra.mxu0 0.0
    %984 = vmatprep.subr.mxu0 0.0
    %985 = vmatpush1.msra.mxu0 0.0
    %986 = vmatprep.subr.mxu0 0.0
    %987 = vmatpush1.msra.mxu0 0.0
    %988 = vmatprep.subr.mxu0 0.0
    %989 = vmatpush1.msra.mxu0 0.0
    %990 = vmatprep.subr.mxu0 0.0
    %991 = vmatpush1.msra.mxu0 0.0
    %992 = vmatprep.subr.mxu0 0.0
    %993 = vmatpush1.msra.mxu0 0.0
    %994 = vmatprep.subr.mxu0 0.0
    %995 = vmatpush1.msra.mxu0 0.0
    %996 = vmatprep.subr.mxu0 0.0
    %997 = vmatpush1.msra.mxu0 %v422
    %998 = vmatprep.subr.mxu0 0.0
    %999 = vmatpush1.msra.mxu0 %v417
    %1000 = vmatprep.subr.mxu0 0.0
    %1001 = vmatpush2.msra.mxu0 0.0
    %1002 = vmatprep.subr.mxu0 0.0
    %1003 = vmatpush2.msra.mxu0 0.0
    %1004 = vmatprep.subr.mxu0 0.0
    %1005 = vmatpush2.msra.mxu0 0.0
    %1006 = vmatprep.subr.mxu0 0.0
    %1007 = vmatpush2.msra.mxu0 0.0
    %1008 = vmatprep.subr.mxu0 0.0
    %1009 = vmatpush2.msra.mxu0 0.0
    %1010 = vmatprep.subr.mxu0 0.0
    %1011 = vmatpush2.msra.mxu0 0.0
    %1012 = vmatprep.subr.mxu0 0.0
    %1013 = vmatpush2.msra.mxu0 0.0
    %1014 = vmatprep.subr.mxu0 0.0
    %1015 = vmatpush2.msra.mxu0 0.0
    %1016 = vmatprep.subr.mxu0 0.0
    %1017 = vmatpush2.msra.mxu0 0.0
    %1018 = vmatprep.subr.mxu0 0.0
    %1019 = vmatpush2.msra.mxu0 0.0
    %1020 = vmatprep.subr.mxu0 0.0
    %1021 = vmatpush2.msra.mxu0 0.0
    %1022 = vmatprep.subr.mxu0 0.0
    %1023 = vmatpush2.msra.mxu0 0.0
    %1024 = vmatprep.subr.mxu0 0.0
    %1025 = vmatpush2.msra.mxu0 0.0
    %1026 = vmatprep.subr.mxu0 0.0
    %1027 = vmatpush2.msra.mxu0 0.0
    %1028 = vmatprep.subr.mxu0 0.0
    %1029 = vmatpush2.msra.mxu0 0.0
    %1030 = vmatprep.subr.mxu0 0.0
    %1031 = vmatpush2.msra.mxu0 0.0
    %1032 = vmatprep.mubr.f32.mxu0 0.0
    %1033 = vmatmul.mubr.f32.gmra.mxu0 %v966
    %v1034 = vpop.f32.mrf.mxu0
    %v1035 = vadd.f32 0.0, %v1034
    %v1036 = vpop.f32.mrf.mxu0
    %1037 = vdwg.mxu0
    %v1039 = vsel %vm761, %v877, 0
    %1041 = vmatprep.subr.mxu0 0.0
    %1042 = vmatpush1.msra.mxu0 0.0
    %1043 = vmatprep.subr.mxu0 0.0
    %1044 = vmatpush1.msra.mxu0 0.0
    %1045 = vmatprep.subr.mxu0 0.0
    %1046 = vmatpush1.msra.mxu0 0.0
    %1047 = vmatprep.subr.mxu0 0.0
    %1048 = vmatpush1.msra.mxu0 0.0
    %1049 = vmatprep.subr.mxu0 0.0
    %1050 = vmatpush1.msra.mxu0 0.0
    %1051 = vmatprep.subr.mxu0 0.0
    %1052 = vmatpush1.msra.mxu0 0.0
    %1053 = vmatprep.subr.mxu0 0.0
    %1054 = vmatpush1.msra.mxu0 0.0
    %1055 = vmatprep.subr.mxu0 0.0
    %1056 = vmatpush1.msra.mxu0 0.0
    %1057 = vmatprep.subr.mxu0 0.0
    %1058 = vmatpush1.msra.mxu0 0.0
    %1059 = vmatprep.subr.mxu0 0.0
    %1060 = vmatpush1.msra.mxu0 0.0
    %1061 = vmatprep.subr.mxu0 0.0
    %1062 = vmatpush1.msra.mxu0 0.0
    %1063 = vmatprep.subr.mxu0 0.0
    %1064 = vmatpush1.msra.mxu0 0.0
    %1065 = vmatprep.subr.mxu0 0.0
    %1066 = vmatpush1.msra.mxu0 0.0
    %1067 = vmatprep.subr.mxu0 0.0
    %1068 = vmatpush1.msra.mxu0 0.0
    %1069 = vmatprep.subr.mxu0 0.0
    %1070 = vmatpush1.msra.mxu0 %v432
    %1071 = vmatprep.subr.mxu0 0.0
    %1072 = vmatpush1.msra.mxu0 %v427
    %1073 = vmatprep.subr.mxu0 0.0
    %1074 = vmatpush2.msra.mxu0 0.0
    %1075 = vmatprep.subr.mxu0 0.0
    %1076 = vmatpush2.msra.mxu0 0.0
    %1077 = vmatprep.subr.mxu0 0.0
    %1078 = vmatpush2.msra.mxu0 0.0
    %1079 = vmatprep.subr.mxu0 0.0
    %1080 = vmatpush2.msra.mxu0 0.0
    %1081 = vmatprep.subr.mxu0 0.0
    %1082 = vmatpush2.msra.mxu0 0.0
    %1083 = vmatprep.subr.mxu0 0.0
    %1084 = vmatpush2.msra.mxu0 0.0
    %1085 = vmatprep.subr.mxu0 0.0
    %1086 = vmatpush2.msra.mxu0 0.0
    %1087 = vmatprep.subr.mxu0 0.0
    %1088 = vmatpush2.msra.mxu0 0.0
    %1089 = vmatprep.subr.mxu0 0.0
    %1090 = vmatpush2.msra.mxu0 0.0
    %1091 = vmatprep.subr.mxu0 0.0
    %1092 = vmatpush2.msra.mxu0 0.0
    %1093 = vmatprep.subr.mxu0 0.0
    %1094 = vmatpush2.msra.mxu0 0.0
    %1095 = vmatprep.subr.mxu0 0.0
    %1096 = vmatpush2.msra.mxu0 0.0
    %1097 = vmatprep.subr.mxu0 0.0
    %1098 = vmatpush2.msra.mxu0 0.0
    %1099 = vmatprep.subr.mxu0 0.0
    %1100 = vmatpush2.msra.mxu0 0.0
    %1101 = vmatprep.subr.mxu0 0.0
    %1102 = vmatpush2.msra.mxu0 0.0
    %1103 = vmatprep.subr.mxu0 0.0
    %1104 = vmatpush2.msra.mxu0 0.0
    %1105 = vmatprep.mubr.f32.mxu0 0.0
    %1106 = vmatmul.mubr.f32.gmra.mxu0 %v1039
    %v1107 = vpop.f32.mrf.mxu0
    %v1108 = vadd.f32 0.0, %v1107
    %v1109 = vpop.f32.mrf.mxu0
    %1110 = vdwg.mxu0
    %v1112 = vsel %vm761, %v879, 0
    %1114 = vmatprep.subr.mxu0 0.0
    %1115 = vmatpush1.msra.mxu0 0.0
    %1116 = vmatprep.subr.mxu0 0.0
    %1117 = vmatpush1.msra.mxu0 0.0
    %1118 = vmatprep.subr.mxu0 0.0
    %1119 = vmatpush1.msra.mxu0 0.0
    %1120 = vmatprep.subr.mxu0 0.0
    %1121 = vmatpush1.msra.mxu0 0.0
    %1122 = vmatprep.subr.mxu0 0.0
    %1123 = vmatpush1.msra.mxu0 0.0
    %1124 = vmatprep.subr.mxu0 0.0
    %1125 = vmatpush1.msra.mxu0 0.0
    %1126 = vmatprep.subr.mxu0 0.0
    %1127 = vmatpush1.msra.mxu0 0.0
    %1128 = vmatprep.subr.mxu0 0.0
    %1129 = vmatpush1.msra.mxu0 0.0
    %1130 = vmatprep.subr.mxu0 0.0
    %1131 = vmatpush1.msra.mxu0 0.0
    %1132 = vmatprep.subr.mxu0 0.0
    %1133 = vmatpush1.msra.mxu0 0.0
    %1134 = vmatprep.subr.mxu0 0.0
    %1135 = vmatpush1.msra.mxu0 0.0
    %1136 = vmatprep.subr.mxu0 0.0
    %1137 = vmatpush1.msra.mxu0 0.0
    %1138 = vmatprep.subr.mxu0 0.0
    %1139 = vmatpush1.msra.mxu0 0.0
    %1140 = vmatprep.subr.mxu0 0.0
    %1141 = vmatpush1.msra.mxu0 0.0
    %1142 = vmatprep.subr.mxu0 0.0
    %1143 = vmatpush1.msra.mxu0 %v442
    %1144 = vmatprep.subr.mxu0 0.0
    %1145 = vmatpush1.msra.mxu0 %v437
    %1146 = vmatprep.subr.mxu0 0.0
    %1147 = vmatpush2.msra.mxu0 0.0
    %1148 = vmatprep.subr.mxu0 0.0
    %1149 = vmatpush2.msra.mxu0 0.0
    %1150 = vmatprep.subr.mxu0 0.0
    %1151 = vmatpush2.msra.mxu0 0.0
    %1152 = vmatprep.subr.mxu0 0.0
    %1153 = vmatpush2.msra.mxu0 0.0
    %1154 = vmatprep.subr.mxu0 0.0
    %1155 = vmatpush2.msra.mxu0 0.0
    %1156 = vmatprep.subr.mxu0 0.0
    %1157 = vmatpush2.msra.mxu0 0.0
    %1158 = vmatprep.subr.mxu0 0.0
    %1159 = vmatpush2.msra.mxu0 0.0
    %1160 = vmatprep.subr.mxu0 0.0
    %1161 = vmatpush2.msra.mxu0 0.0
    %1162 = vmatprep.subr.mxu0 0.0
    %1163 = vmatpush2.msra.mxu0 0.0
    %1164 = vmatprep.subr.mxu0 0.0
    %1165 = vmatpush2.msra.mxu0 0.0
    %1166 = vmatprep.subr.mxu0 0.0
    %1167 = vmatpush2.msra.mxu0 0.0
    %1168 = vmatprep.subr.mxu0 0.0
    %1169 = vmatpush2.msra.mxu0 0.0
    %1170 = vmatprep.subr.mxu0 0.0
    %1171 = vmatpush2.msra.mxu0 0.0
    %1172 = vmatprep.subr.mxu0 0.0
    %1173 = vmatpush2.msra.mxu0 0.0
    %1174 = vmatprep.subr.mxu0 0.0
    %1175 = vmatpush2.msra.mxu0 0.0
    %1176 = vmatprep.subr.mxu0 0.0
    %1177 = vmatpush2.msra.mxu0 0.0
    %1178 = vmatprep.mubr.f32.mxu0 0.0
    %1179 = vmatmul.mubr.f32.gmra.mxu0 %v1112
    %v1180 = vpop.f32.mrf.mxu0
    %v1181 = vadd.f32 0.0, %v1180
    %v1182 = vpop.f32.mrf.mxu0
    %1183 = vdwg.mxu0
    %v1184 = vrcp.pop %v882
    %v1185 = vmul.f32 %v962, %v1184
    %v1186 = vrcp.pop %v885
    %v1187 = vmul.f32 %v1035, %v1186
    %v1188 = vrcp.pop %v888
    %v1189 = vmul.f32 %v1108, %v1188
    %v1190 = vrcp.pop %v891
    %v1191 = vmul.f32 %v1181, %v1190
    %1192 = vst.msk [vmem:[#allocation2] sm:$0xff] %vm51, %v1185
    %1193 = vst.msk [vmem:[#allocation2 + $0x8] sm:$0xff] %vm51, %v1187
    %1194 = vst.msk [vmem:[#allocation2 + $0x10] sm:$0xff] %vm51, %v1189
    %1195 = vst.msk [vmem:[#allocation2 + $0x18] sm:$0xff] %vm51, %v1191
    // Predicated region
    $region38: #{tpu_custom_call.1} parent=1 // pred_check
      _
    $region39: #{tpu_custom_call.1} parent=1 // pred_check_branch
      %1197 = sbr.rel (0) target = $region41
    $region40: #{tpu_custom_call.1} parent=1 // pred_region
      %s1199 = ssub.s32 512, 512
      %1200 = vsyncadd [#allocation3], %s1199
      %s1201 = sshll.u32 [#allocation2], 4
      %s1202 = int_to_ptr.vmem [resolvable:$true] %s1201
      %1207 = dma.vmem_to_hbm [thread:$0]  %s1202, 512, %s9, [#allocation3], 128, 128, 8
    $region41: #{tpu_custom_call.1} parent=1 // pred_fallthru
      _
    // Predicated region
    $region42: #{tpu_custom_call.1} parent=1 // pred_check
      _
    $region43: #{tpu_custom_call.1} parent=1 // pred_check_branch
      %1209 = sbr.rel (0) target = $region45
    $region44: #{tpu_custom_call.1} parent=1 // pred_region
      %s1211 = ssub.s32 64, 64
      %1212 = vsyncadd [#allocation5], %s1211
      %s1214 = sshll.u32 [#allocation4], 4
      %s1215 = int_to_ptr.vmem [resolvable:$true] %s1214
      %1217 = dma.vmem_to_hbm [thread:$0]  %s1215, 64, %s10, [#allocation5]
    $region45: #{tpu_custom_call.1} parent=1 // pred_fallthru
      _
    // Predicated region
    $region46: #{tpu_custom_call.1} parent=1 // pred_check
      _
    $region47: #{tpu_custom_call.1} parent=1 // pred_check_branch
      %1219 = sbr.rel (0) target = $region49
    $region48: #{tpu_custom_call.1} parent=1 // pred_region
      %1220 = dma.done [#allocation3], 512
    $region49: #{tpu_custom_call.1} parent=1 // pred_fallthru
      _
    // Predicated region
    $region50: #{tpu_custom_call.1} parent=1 // pred_check
      _
    $region51: #{tpu_custom_call.1} parent=1 // pred_check_branch
      %1222 = sbr.rel (0) target = $region53
    $region52: #{tpu_custom_call.1} parent=1 // pred_region
      %1223 = dma.done [#allocation5], 64
    $region53: #{tpu_custom_call.1} parent=1 // pred_fallthru
      _
    %1224 = vsyncpa [#allocation3], 1
    %1225 = vsyncpa [#allocation5], 1

</llo_original>
